<compile_context>
chip_gen: v6e
topology: v6e:2x2x1
jax: 0.10.0
libtpu: 0.0.40
codegen_flags: <defaults>
</compile_context>

<pallas_src>
import jax
import jax.numpy as jnp
from jax.experimental import pallas as pl
from jax.experimental.pallas import tpu as pltpu  # noqa: F401  (not needed at this size)


# ----------------------------------------------------------------------------
# Kernel (single invocation, whole problem in VMEM).
#   hid_ref : (B, H)        hidden state rows
#   enc_ref : (T*B, H)      encoder outputs flattened row index = t*B + b (natural layout)
#   w_ref   : (2H+2, H)     rows [0:H]=W_h^T, [H:2H]=W_e^T, [2H]=bias, [2H+1]=v
#   attn_ref: (B, T)        lane-dense softmax output slab
# ----------------------------------------------------------------------------
def _attention_kernel(hid_ref, enc_ref, w_ref, attn_ref):
    B, H = hid_ref.shape
    TB = enc_ref.shape[0]
    T = TB // B

    hid = hid_ref[...]                         # (B, H)
    enc = enc_ref[...]                         # (T*B, H)
    w = w_ref[...]                             # (2H+2, H)

    w_h_t = w[:H, :]                           # (H, H)  == attention.weight[:, :H].T
    w_e_t = w[H:2 * H, :]                      # (H, H)  == attention.weight[:, H:].T
    bias_row = w[2 * H:2 * H + 1, :]           # (1, H)
    v_row = w[2 * H + 1:2 * H + 2, :]          # (1, H)

    # Batched projections: one MXU dot over all T*B rows, one tiny dot for hidden.
    e_proj = jnp.dot(enc, w_e_t, preferred_element_type=jnp.float32)   # (T*B, H)
    h_proj = jnp.dot(hid, w_h_t, preferred_element_type=jnp.float32)   # (B, H)

    # Broadcast hidden projection over timesteps (row index = t*B + b) and add bias.
    energy = jnp.tanh(e_proj + jnp.tile(h_proj, (T, 1)) + bias_row)    # (T*B, H)

    # v-weighted lane reduction -> (T*B, 1) column of scores.
    scores_col = jnp.sum(v_row * energy, axis=1, keepdims=True)        # (T*B, 1)

    # Small in-kernel relayout to a lane-dense (B, T) row layout.
    scores_bt = jnp.transpose(jnp.reshape(scores_col, (T, B)))         # (B, T)

    # Softmax over T along lanes; normalize with one exact reciprocal multiply.
    m = jnp.max(scores_bt, axis=1, keepdims=True)                      # (B, 1)
    p = jnp.exp(scores_bt - m)                                         # (B, T)
    inv = pl.reciprocal(jnp.sum(p, axis=1, keepdims=True), approx=False)
    attn_ref[...] = p * inv                                            # single lane-dense store


# ----------------------------------------------------------------------------
# One-time weight layout (hoisted out of the per-call path): a single slab.
# ----------------------------------------------------------------------------
def prepare_attention_params(att_w, att_b, att_v):
    """att_w: (H, 2H) Linear weight; att_b: (H,); att_v: (H,) -> one (2H+2, H) slab."""
    H = att_b.shape[0]
    wslab = jnp.concatenate(
        [att_w[:, :H].T,            # (H, H)  W_h^T
         att_w[:, H:].T,            # (H, H)  W_e^T
         att_b[None, :],            # (1, H)  bias
         att_v[None, :]],           # (1, H)  v
        axis=0)
    return wslab.astype(jnp.float32)


# ----------------------------------------------------------------------------
# Forward wrapper: only free (contiguous) reshapes outside the kernel.
# ----------------------------------------------------------------------------
@jax.jit
def attention_forward(wslab, hidden, encoder_outputs):
    T, B, H = encoder_outputs.shape

    hid2d = hidden[0]                                      # (B, H)     view, free
    enc_flat = encoder_outputs.reshape(T * B, H)           # (T*B, H)   contiguous, free

    attn = pl.pallas_call(
        _attention_kernel,
        out_shape=jax.ShapeDtypeStruct((B, T), jnp.float32),
        in_specs=[
            pl.BlockSpec((B, H), lambda: (0, 0)),          # hidden rows
            pl.BlockSpec((T * B, H), lambda: (0, 0)),      # encoder outputs, natural layout
            pl.BlockSpec((2 * H + 2, H), lambda: (0, 0)),  # packed weight/bias/v slab
        ],
        out_specs=pl.BlockSpec((B, T), lambda: (0, 0)),    # one lane-dense slab
    )(hid2d, enc_flat, wslab)

    return attn.reshape(B, 1, T)                           # contiguous, free


# ----------------------------------------------------------------------------
# Pure-JAX reference (mirrors the PyTorch forward exactly) for verification.
# ----------------------------------------------------------------------------
def attention_reference(att_w, att_b, att_v, hidden, encoder_outputs):
    T, B, H = encoder_outputs.shape
    h = jnp.transpose(jnp.tile(hidden, (T, 1, 1)), (1, 0, 2))            # (B, T, H)
    enc = jnp.transpose(encoder_outputs, (1, 0, 2))                      # (B, T, H)
    cat = jnp.concatenate([h, enc], axis=2)                              # (B, T, 2H)
    energies = jnp.sum(att_v * jnp.tanh(cat @ att_w.T + att_b), axis=2)  # (B, T)
    return jax.nn.softmax(energies, axis=1)[:, None, :]                  # (B, 1, T)


if __name__ == "__main__":
    hidden_size, T, B = 32, 8, 2

    key = jax.random.PRNGKey(0)
    kw, kb, kv, kh, ke = jax.random.split(key, 5)

    # nn.Linear(2H, H) default init + torch.rand(H) for v
    s = float(2 * hidden_size) ** -0.5
    att_w = jax.random.uniform(kw, (hidden_size, 2 * hidden_size), jnp.float32, -s, s)
    att_b = jax.random.uniform(kb, (hidden_size,), jnp.float32, -s, s)
    att_v = jax.random.uniform(kv, (hidden_size,), jnp.float32)

    hidden = jax.random.normal(kh, (1, B, hidden_size), jnp.float32)
    encoder_outputs = jax.random.normal(ke, (T, B, hidden_size), jnp.float32)

    # Weight layout done once (per model), not per call.
    wslab = prepare_attention_params(att_w, att_b, att_v)

    attn = attention_forward(wslab, hidden, encoder_outputs)
    jax.block_until_ready(attn)

    ref = attention_reference(att_w, att_b, att_v, hidden, encoder_outputs)
    assert attn.shape == (B, 1, T)
    assert jnp.allclose(attn, ref, atol=1e-5, rtol=1e-5)
    assert jnp.allclose(jnp.sum(attn, axis=-1), 1.0, atol=1e-5)

    print("KERNEL_OK")
</pallas_src>

<mosaic_0001>
module attributes {stable_mosaic.version = 11 : i64} {
  func.func @_attention_kernel(%arg0: memref<2x32xf32, #tpu.memory_space<vmem>>, %arg1: memref<16x32xf32, #tpu.memory_space<vmem>>, %arg2: memref<66x32xf32, #tpu.memory_space<vmem>>, %arg3: memref<2x8xf32, #tpu.memory_space<vmem>>) attributes {dimension_semantics = [], scalar_prefetch = 0 : i64, scratch_operands = 0 : i64, tpu.core_type = #tpu.core_type<tc>} {
    %c0 = arith.constant 0 : index
    %c0_0 = arith.constant 0 : index
    %0 = vector.load %arg0[%c0, %c0_0] : memref<2x32xf32, #tpu.memory_space<vmem>>, vector<2x32xf32>
    %c0_1 = arith.constant 0 : index
    %c0_2 = arith.constant 0 : index
    %1 = vector.load %arg1[%c0_1, %c0_2] : memref<16x32xf32, #tpu.memory_space<vmem>>, vector<16x32xf32>
    %c0_3 = arith.constant 0 : index
    %c0_4 = arith.constant 0 : index
    %2 = vector.load %arg2[%c0_3, %c0_4] : memref<66x32xf32, #tpu.memory_space<vmem>>, vector<66x32xf32>
    %3 = vector.extract_strided_slice %2 {offsets = [0, 0], sizes = [32, 32], strides = [1, 1]} : vector<66x32xf32> to vector<32x32xf32>
    %4 = vector.extract_strided_slice %2 {offsets = [32, 0], sizes = [32, 32], strides = [1, 1]} : vector<66x32xf32> to vector<32x32xf32>
    %5 = vector.extract_strided_slice %2 {offsets = [64, 0], sizes = [1, 32], strides = [1, 1]} : vector<66x32xf32> to vector<1x32xf32>
    %6 = vector.extract_strided_slice %2 {offsets = [65, 0], sizes = [1, 32], strides = [1, 1]} : vector<66x32xf32> to vector<1x32xf32>
    %cst = arith.constant dense<0.000000e+00> : vector<16x32xf32>
    %7 = tpu.matmul %1, %4, %cst {dimension_numbers = #tpu.dot_dimension_numbers<[1], [0], [0], [1], [0, 0, 1, 1], [], []>} : vector<16x32xf32>, vector<32x32xf32>, vector<16x32xf32> -> vector<16x32xf32>
    %cst_5 = arith.constant dense<0.000000e+00> : vector<2x32xf32>
    %8 = tpu.matmul %0, %3, %cst_5 {dimension_numbers = #tpu.dot_dimension_numbers<[1], [0], [0], [1], [0, 0, 1, 1], [], []>} : vector<2x32xf32>, vector<32x32xf32>, vector<2x32xf32> -> vector<2x32xf32>
    %9 = tpu.concatenate %8, %8, %8, %8, %8, %8, %8, %8 in 0 : vector<2x32xf32>, vector<2x32xf32>, vector<2x32xf32>, vector<2x32xf32>, vector<2x32xf32>, vector<2x32xf32>, vector<2x32xf32>, vector<2x32xf32> -> vector<16x32xf32>
    %10 = arith.addf %7, %9 : vector<16x32xf32>
    %11 = vector.broadcast %5 : vector<1x32xf32> to vector<16x32xf32>
    %12 = arith.addf %10, %11 : vector<16x32xf32>
    %13 = math.tanh %12 : vector<16x32xf32>
    %14 = vector.broadcast %6 : vector<1x32xf32> to vector<16x32xf32>
    %15 = arith.mulf %14, %13 : vector<16x32xf32>
    %cst_6 = arith.constant dense<0.000000e+00> : vector<16xf32>
    %16 = vector.multi_reduction <add>, %15, %cst_6 [1] : vector<16x32xf32> to vector<16xf32>
    %17 = vector.shape_cast %16 : vector<16xf32> to vector<16x1xf32>
    %18 = vector.shape_cast %17 : vector<16x1xf32> to vector<8x2xf32>
    %19 = tpu.transpose %18, [1, 0] : vector<8x2xf32> -> vector<2x8xf32>
    %cst_7 = arith.constant dense<0xFF800000> : vector<2xf32>
    %20 = vector.multi_reduction <maximumf>, %19, %cst_7 [1] : vector<2x8xf32> to vector<2xf32>
    %21 = vector.shape_cast %20 : vector<2xf32> to vector<2x1xf32>
    %22 = vector.broadcast %21 : vector<2x1xf32> to vector<2x8xf32>
    %23 = arith.subf %19, %22 : vector<2x8xf32>
    %24 = math.exp %23 : vector<2x8xf32>
    %cst_8 = arith.constant dense<0.000000e+00> : vector<2xf32>
    %25 = vector.multi_reduction <add>, %24, %cst_8 [1] : vector<2x8xf32> to vector<2xf32>
    %26 = vector.shape_cast %25 : vector<2xf32> to vector<2x1xf32>
    %27 = tpu.reciprocal %26 : vector<2x1xf32> -> vector<2x1xf32>
    %28 = vector.broadcast %27 : vector<2x1xf32> to vector<2x8xf32>
    %29 = arith.mulf %24, %28 : vector<2x8xf32>
    %c0_9 = arith.constant 0 : index
    %c0_10 = arith.constant 0 : index
    %30 = vector.load %arg3[%c0_9, %c0_10] : memref<2x8xf32, #tpu.memory_space<vmem>>, vector<2x8xf32>
    tpu.vector_store %arg3[%c0_9, %c0_10], %29 {strides = array<i32>} : memref<2x8xf32, #tpu.memory_space<vmem>>, vector<2x8xf32>,
    return
  }
}

</mosaic_0001>

<llo_original>
// kernel: attention_forward.1
$region0: #{attention_forward.1}
  #allocation0 [shape = 'u32[]', space=smem, size = 0x4, offset = 0x4, fixed_abs, tag = 'smem constant byte address 0x4 - core index']
  #allocation1 [shape = 'u32[144,128]{1,0:T(1,128)}', space=vmem, size = 0x12000, scoped, tag = 'internal scratch']
  %s0 = inlined_call_operand.vmem [shape: f32[2,32], index: 0, kind: input, shape index: {}]
  %s1 = inlined_call_operand.vmem [shape: f32[16,32], index: 1, kind: input, shape index: {}]
  %s2 = inlined_call_operand.vmem [shape: f32[66,32], index: 2, kind: input, shape index: {}]
  %s3 = inlined_call_operand.hbm [shape: f32[2,8], index: 3, kind: output, shape index: {}]
  %s4 = sld [smem:[#allocation0]]
  $region22: #{attention_forward.1} parent=0
    _
  %s6 = ssub.s32 1, %s4
  %s7 = scalar_select 0, %s6, %s4
  $region1: #{attention_forward.1} parent=0
    #allocation2 [shape = 'u8[1024]{0}', space=vmem, size = 0x400, scoped, tag = 'output window, operand 0, single buffered']
    #allocation3 [shape = 's32[1]{0}', space=sflag, size = 0x4, scoped, tag = 'scoped memory for attention_forward.1']
    %8 = vsyncpa [#allocation3], 0
    // Predicated region
    $region2: #{attention_forward.1} parent=1 // pred_check
      _
    $region3: #{attention_forward.1} parent=1 // pred_check_branch
      %10 = sbr.rel (0) target = $region5
    $region4: #{attention_forward.1} parent=1 // pred_region
      _
    $region5: #{attention_forward.1} parent=1 // pred_fallthru
      _
    // Predicated region
    $region6: #{attention_forward.1} parent=1 // pred_check
      _
    $region7: #{attention_forward.1} parent=1 // pred_check_branch
      %12 = sbr.rel (0) target = $region9
    $region8: #{attention_forward.1} parent=1 // pred_region
      _
    $region9: #{attention_forward.1} parent=1 // pred_fallthru
      _
    // Predicated region
    $region10: #{attention_forward.1} parent=1 // pred_check
      _
    $region11: #{attention_forward.1} parent=1 // pred_check_branch
      %14 = sbr.rel (0) target = $region13
    $region12: #{attention_forward.1} parent=1 // pred_region
      _
    $region13: #{attention_forward.1} parent=1 // pred_fallthru
      _
    %v15 = vld [vmem:[%s0] sm:$0x3]
    %v16 = vld [vmem:[%s1] sm:$0xff]
    %v17 = vld [vmem:[%s1 + $0x8] sm:$0xff]
    %v18 = vld [vmem:[%s2] sm:$0xff]
    %v19 = vld [vmem:[%s2 + $0x8] sm:$0xff]
    %v20 = vld [vmem:[%s2 + $0x10] sm:$0xff]
    %v21 = vld [vmem:[%s2 + $0x18] sm:$0xff]
    %v22 = vld [vmem:[%s2 + $0x20] sm:$0xff]
    %v23 = vld [vmem:[%s2 + $0x28] sm:$0xff]
    %v24 = vld [vmem:[%s2 + $0x30] sm:$0xff]
    %v25 = vld [vmem:[%s2 + $0x38] sm:$0xff]
    %v26 = vld [vmem:[%s2 + $0x40] sm:$0x3]
    %vm27 = vcmask 261120
    %v29 = vsel %vm27, %v15, 0
    %31 = vmatprep.subr.mxu0 0.0
    %32 = vmatpush1.msra.mxu0 0.0
    %33 = vmatprep.subr.mxu0 0.0
    %34 = vmatpush1.msra.mxu0 0.0
    %35 = vmatprep.subr.mxu0 0.0
    %36 = vmatpush1.msra.mxu0 0.0
    %37 = vmatprep.subr.mxu0 0.0
    %38 = vmatpush1.msra.mxu0 0.0
    %39 = vmatprep.subr.mxu0 0.0
    %40 = vmatpush1.msra.mxu0 0.0
    %41 = vmatprep.subr.mxu0 0.0
    %42 = vmatpush1.msra.mxu0 0.0
    %43 = vmatprep.subr.mxu0 0.0
    %44 = vmatpush1.msra.mxu0 0.0
    %45 = vmatprep.subr.mxu0 0.0
    %46 = vmatpush1.msra.mxu0 0.0
    %47 = vmatprep.subr.mxu0 0.0
    %48 = vmatpush1.msra.mxu0 0.0
    %49 = vmatprep.subr.mxu0 0.0
    %50 = vmatpush1.msra.mxu0 0.0
    %51 = vmatprep.subr.mxu0 0.0
    %52 = vmatpush1.msra.mxu0 0.0
    %53 = vmatprep.subr.mxu0 0.0
    %54 = vmatpush1.msra.mxu0 0.0
    %55 = vmatprep.subr.mxu0 0.0
    %56 = vmatpush1.msra.mxu0 %v21
    %57 = vmatprep.subr.mxu0 0.0
    %58 = vmatpush1.msra.mxu0 %v20
    %59 = vmatprep.subr.mxu0 0.0
    %60 = vmatpush1.msra.mxu0 %v19
    %61 = vmatprep.subr.mxu0 0.0
    %62 = vmatpush1.msra.mxu0 %v18
    %63 = vmatprep.subr.mxu0 0.0
    %64 = vmatpush2.msra.mxu0 0.0
    %65 = vmatprep.subr.mxu0 0.0
    %66 = vmatpush2.msra.mxu0 0.0
    %67 = vmatprep.subr.mxu0 0.0
    %68 = vmatpush2.msra.mxu0 0.0
    %69 = vmatprep.subr.mxu0 0.0
    %70 = vmatpush2.msra.mxu0 0.0
    %71 = vmatprep.subr.mxu0 0.0
    %72 = vmatpush2.msra.mxu0 0.0
    %73 = vmatprep.subr.mxu0 0.0
    %74 = vmatpush2.msra.mxu0 0.0
    %75 = vmatprep.subr.mxu0 0.0
    %76 = vmatpush2.msra.mxu0 0.0
    %77 = vmatprep.subr.mxu0 0.0
    %78 = vmatpush2.msra.mxu0 0.0
    %79 = vmatprep.subr.mxu0 0.0
    %80 = vmatpush2.msra.mxu0 0.0
    %81 = vmatprep.subr.mxu0 0.0
    %82 = vmatpush2.msra.mxu0 0.0
    %83 = vmatprep.subr.mxu0 0.0
    %84 = vmatpush2.msra.mxu0 0.0
    %85 = vmatprep.subr.mxu0 0.0
    %86 = vmatpush2.msra.mxu0 0.0
    %87 = vmatprep.subr.mxu0 0.0
    %88 = vmatpush2.msra.mxu0 0.0
    %89 = vmatprep.subr.mxu0 0.0
    %90 = vmatpush2.msra.mxu0 0.0
    %91 = vmatprep.subr.mxu0 0.0
    %92 = vmatpush2.msra.mxu0 0.0
    %93 = vmatprep.subr.mxu0 0.0
    %94 = vmatpush2.msra.mxu0 0.0
    %95 = vmatprep.mubr.f32.mxu0 0.0
    %96 = vmatmul.mubr.f32.gmra.mxu0 %v29
    %v97 = vpop.f32.mrf.mxu0
    %v98 = vadd.f32 0.0, %v97
    %v99 = vpop.f32.mrf.mxu0
    %100 = vdwg.mxu0
    %v102 = vrot.slane %v98, 6
    %v104 = vrot.slane %v98, 4
    %v106 = vrot.slane %v98, 2
    %vm108 = vcmask 1041408
    %v109 = vsel %vm108, %v98, %v102
    %vm110 = vcmask 1043456
    %v111 = vsel %vm110, %v109, %v104
    %vm112 = vcmask 1045504
    %v113 = vsel %vm112, %v111, %v106
    %v115 = vsel %vm27, %v16, 0
    %v118 = vsel %vm27, %v17, 0
    %120 = vmatprep.subr.mxu0 0.0
    %121 = vmatpush1.msra.mxu0 0.0
    %122 = vmatprep.subr.mxu0 0.0
    %123 = vmatpush1.msra.mxu0 0.0
    %124 = vmatprep.subr.mxu0 0.0
    %125 = vmatpush1.msra.mxu0 0.0
    %126 = vmatprep.subr.mxu0 0.0
    %127 = vmatpush1.msra.mxu0 0.0
    %128 = vmatprep.subr.mxu0 0.0
    %129 = vmatpush1.msra.mxu0 0.0
    %130 = vmatprep.subr.mxu0 0.0
    %131 = vmatpush1.msra.mxu0 0.0
    %132 = vmatprep.subr.mxu0 0.0
    %133 = vmatpush1.msra.mxu0 0.0
    %134 = vmatprep.subr.mxu0 0.0
    %135 = vmatpush1.msra.mxu0 0.0
    %136 = vmatprep.subr.mxu0 0.0
    %137 = vmatpush1.msra.mxu0 0.0
    %138 = vmatprep.subr.mxu0 0.0
    %139 = vmatpush1.msra.mxu0 0.0
    %140 = vmatprep.subr.mxu0 0.0
    %141 = vmatpush1.msra.mxu0 0.0
    %142 = vmatprep.subr.mxu0 0.0
    %143 = vmatpush1.msra.mxu0 0.0
    %144 = vmatprep.subr.mxu0 0.0
    %145 = vmatpush1.msra.mxu0 %v25
    %146 = vmatprep.subr.mxu0 0.0
    %147 = vmatpush1.msra.mxu0 %v24
    %148 = vmatprep.subr.mxu0 0.0
    %149 = vmatpush1.msra.mxu0 %v23
    %150 = vmatprep.subr.mxu0 0.0
    %151 = vmatpush1.msra.mxu0 %v22
    %152 = vmatprep.subr.mxu0 0.0
    %153 = vmatpush2.msra.mxu0 0.0
    %154 = vmatprep.subr.mxu0 0.0
    %155 = vmatpush2.msra.mxu0 0.0
    %156 = vmatprep.subr.mxu0 0.0
    %157 = vmatpush2.msra.mxu0 0.0
    %158 = vmatprep.subr.mxu0 0.0
    %159 = vmatpush2.msra.mxu0 0.0
    %160 = vmatprep.subr.mxu0 0.0
    %161 = vmatpush2.msra.mxu0 0.0
    %162 = vmatprep.subr.mxu0 0.0
    %163 = vmatpush2.msra.mxu0 0.0
    %164 = vmatprep.subr.mxu0 0.0
    %165 = vmatpush2.msra.mxu0 0.0
    %166 = vmatprep.subr.mxu0 0.0
    %167 = vmatpush2.msra.mxu0 0.0
    %168 = vmatprep.subr.mxu0 0.0
    %169 = vmatpush2.msra.mxu0 0.0
    %170 = vmatprep.subr.mxu0 0.0
    %171 = vmatpush2.msra.mxu0 0.0
    %172 = vmatprep.subr.mxu0 0.0
    %173 = vmatpush2.msra.mxu0 0.0
    %174 = vmatprep.subr.mxu0 0.0
    %175 = vmatpush2.msra.mxu0 0.0
    %176 = vmatprep.subr.mxu0 0.0
    %177 = vmatpush2.msra.mxu0 0.0
    %178 = vmatprep.subr.mxu0 0.0
    %179 = vmatpush2.msra.mxu0 0.0
    %180 = vmatprep.subr.mxu0 0.0
    %181 = vmatpush2.msra.mxu0 0.0
    %182 = vmatprep.subr.mxu0 0.0
    %183 = vmatpush2.msra.mxu0 0.0
    %184 = vmatprep.mubr.f32.mxu0 0.0
    %185 = vmatmul.mubr.f32.gmra.mxu0 %v115
    %v186 = vpop.f32.mrf.mxu0
    %v187 = vadd.f32 %v113, %v186
    %v188 = vpop.f32.mrf.mxu0
    %189 = vmatprep.mubr.f32.mxu0 0.0
    %190 = vmatmul.mubr.f32.gmra.mxu0 %v118
    %v191 = vpop.f32.mrf.mxu0
    %v192 = vadd.f32 %v113, %v191
    %v193 = vpop.f32.mrf.mxu0
    %194 = vdwg.mxu0
    %v195 = vlaneseq
    %v196 = vshrl.u32 %v195, 7
    %v197 = vsub.s32 0, %v196
    %v198 = vrot.slane %v26, %v197
    %v199 = vadd.f32 %v187, %v198
    %v200 = vadd.f32 %v192, %v198
    %v201 = vtanh.pop %v199
    %v202 = vtanh.pop %v200
    %v203 = vlaneseq
    %v204 = vshrl.u32 %v203, 7
    %v205 = vsub.s32 1, %v204
    %v206 = vrot.slane %v26, %v205
    %v207 = vmul.f32 %v206, %v201
    %v208 = vmul.f32 %v206, %v202
    %v209 = vsel %vm27, %v207, 0.0
    %210 = vadd.xlane.f32.xlu0 %v209
    %v211 = vpop.xlane.xlu0 %210
    %v212 = vsel %vm27, %v208, 0.0
    %213 = vadd.xlane.f32.xlu0 %v212
    %v214 = vpop.xlane.xlu0 %213
    %v218 = vunpack.c.l.s4 269488144
    %v219 = vunpack.c.0.s8 %v218
    %v220 = vlaneseq
    %v221 = vshrl.u32 %v220, 7
    %v222 = vsub.s32 %v219, %v221
    %v223 = vrot.slane %v211, %v222
    %v225 = vunpack.c.l.s4 842150450
    %v226 = vunpack.c.0.s8 %v225
    %v227 = vlaneseq
    %v228 = vshrl.u32 %v227, 7
    %v229 = vsub.s32 %v226, %v228
    %v230 = vrot.slane %v211, %v229
    %v232 = vunpack.c.l.s4 1414812756
    %v233 = vunpack.c.0.s8 %v232
    %v234 = vlaneseq
    %v235 = vshrl.u32 %v234, 7
    %v236 = vsub.s32 %v233, %v235
    %v237 = vrot.slane %v211, %v236
    %v239 = vunpack.c.l.s4 1987475062
    %v240 = vunpack.c.0.s8 %v239
    %v241 = vlaneseq
    %v242 = vshrl.u32 %v241, 7
    %v243 = vsub.s32 %v240, %v242
    %v244 = vrot.slane %v211, %v243
    %v246 = vunpack.c.l.s4 269488144
    %v247 = vunpack.c.0.s8 %v246
    %v248 = vlaneseq
    %v249 = vshrl.u32 %v248, 7
    %v250 = vsub.s32 %v247, %v249
    %v251 = vrot.slane %v214, %v250
    %v253 = vunpack.c.l.s4 842150450
    %v254 = vunpack.c.0.s8 %v253
    %v255 = vlaneseq
    %v256 = vshrl.u32 %v255, 7
    %v257 = vsub.s32 %v254, %v256
    %v258 = vrot.slane %v214, %v257
    %v260 = vunpack.c.l.s4 1414812756
    %v261 = vunpack.c.0.s8 %v260
    %v262 = vlaneseq
    %v263 = vshrl.u32 %v262, 7
    %v264 = vsub.s32 %v261, %v263
    %v265 = vrot.slane %v214, %v264
    %v267 = vunpack.c.l.s4 1987475062
    %v268 = vunpack.c.0.s8 %v267
    %v269 = vlaneseq
    %v270 = vshrl.u32 %v269, 7
    %v271 = vsub.s32 %v268, %v270
    %v272 = vrot.slane %v214, %v271
    %v274 = vunpack.c.l.s4 1983009808
    %v275 = vunpack.c.0.s8 %v274
    %v276 = vlaneseq
    %v277 = vshrl.u32 %v276, 7
    %v278 = vsub.s32 %v275, %v277
    %v279 = vrot.slane %v223, %v278
    %v281 = vunpack.c.l.s4 1983009808
    %v282 = vunpack.c.0.s8 %v281
    %v283 = vlaneseq
    %v284 = vshrl.u32 %v283, 7
    %v285 = vsub.s32 %v282, %v284
    %v286 = vrot.slane %v230, %v285
    %v288 = vunpack.c.l.s4 1983009808
    %v289 = vunpack.c.0.s8 %v288
    %v290 = vlaneseq
    %v291 = vshrl.u32 %v290, 7
    %v292 = vsub.s32 %v289, %v291
    %v293 = vrot.slane %v237, %v292
    %v295 = vunpack.c.l.s4 1983009808
    %v296 = vunpack.c.0.s8 %v295
    %v297 = vlaneseq
    %v298 = vshrl.u32 %v297, 7
    %v299 = vsub.s32 %v296, %v298
    %v300 = vrot.slane %v244, %v299
    %v302 = vunpack.c.l.s4 1983009808
    %v303 = vunpack.c.0.s8 %v302
    %v304 = vlaneseq
    %v305 = vshrl.u32 %v304, 7
    %v306 = vsub.s32 %v303, %v305
    %v307 = vrot.slane %v251, %v306
    %v309 = vunpack.c.l.s4 1983009808
    %v310 = vunpack.c.0.s8 %v309
    %v311 = vlaneseq
    %v312 = vshrl.u32 %v311, 7
    %v313 = vsub.s32 %v310, %v312
    %v314 = vrot.slane %v258, %v313
    %v316 = vunpack.c.l.s4 1983009808
    %v317 = vunpack.c.0.s8 %v316
    %v318 = vlaneseq
    %v319 = vshrl.u32 %v318, 7
    %v320 = vsub.s32 %v317, %v319
    %v321 = vrot.slane %v265, %v320
    %v323 = vunpack.c.l.s4 1983009808
    %v324 = vunpack.c.0.s8 %v323
    %v325 = vlaneseq
    %v326 = vshrl.u32 %v325, 7
    %v327 = vsub.s32 %v324, %v326
    %v328 = vrot.slane %v272, %v327
    %329 = vset.pattern.permute.xlu0 0
    %330 = vperm.xlu0 %329, %v279
    %v331 = vpop.permute.xlu0 %330
    %332 = vset.pattern.permute.xlu0 0
    %333 = vperm.xlu0 %332, %v286
    %v334 = vpop.permute.xlu0 %333
    %335 = vset.pattern.permute.xlu0 0
    %336 = vperm.xlu0 %335, %v293
    %v337 = vpop.permute.xlu0 %336
    %338 = vset.pattern.permute.xlu0 0
    %339 = vperm.xlu0 %338, %v300
    %v340 = vpop.permute.xlu0 %339
    %341 = vset.pattern.permute.xlu0 0
    %342 = vperm.xlu0 %341, %v307
    %v343 = vpop.permute.xlu0 %342
    %344 = vset.pattern.permute.xlu0 0
    %345 = vperm.xlu0 %344, %v314
    %v346 = vpop.permute.xlu0 %345
    %347 = vset.pattern.permute.xlu0 0
    %348 = vperm.xlu0 %347, %v321
    %v349 = vpop.permute.xlu0 %348
    %350 = vset.pattern.permute.xlu0 0
    %351 = vperm.xlu0 %350, %v328
    %v352 = vpop.permute.xlu0 %351
    %v353 = vlaneseq
    %v354 = vand.u32 %v353, 127
    %v355 = vlaneseq
    %v356 = vshrl.u32 %v355, 7
    %v357 = vsub.s32 %v354, %v356
    %v358 = vrot.slane %v331, %v357
    %v359 = vlaneseq
    %v360 = vshrl.u32 %v359, 7
    %v361 = vsub.s32 %v354, %v360
    %v362 = vrot.slane %v334, %v361
    %v363 = vlaneseq
    %v364 = vshrl.u32 %v363, 7
    %v365 = vsub.s32 %v354, %v364
    %v366 = vrot.slane %v337, %v365
    %v367 = vlaneseq
    %v368 = vshrl.u32 %v367, 7
    %v369 = vsub.s32 %v354, %v368
    %v370 = vrot.slane %v340, %v369
    %v371 = vlaneseq
    %v372 = vshrl.u32 %v371, 7
    %v373 = vsub.s32 %v354, %v372
    %v374 = vrot.slane %v343, %v373
    %v375 = vlaneseq
    %v376 = vshrl.u32 %v375, 7
    %v377 = vsub.s32 %v354, %v376
    %v378 = vrot.slane %v346, %v377
    %v379 = vlaneseq
    %v380 = vshrl.u32 %v379, 7
    %v381 = vsub.s32 %v354, %v380
    %v382 = vrot.slane %v349, %v381
    %v383 = vlaneseq
    %v384 = vshrl.u32 %v383, 7
    %v385 = vsub.s32 %v354, %v384
    %v386 = vrot.slane %v352, %v385
    %vm387 = vcmask 1041409
    %v388 = vsel %vm387, %v362, %v358
    %vm389 = vcmask 1042434
    %v390 = vsel %vm389, %v366, %v388
    %vm391 = vcmask 1043459
    %v392 = vsel %vm391, %v370, %v390
    %vm393 = vcmask 1044484
    %v394 = vsel %vm393, %v374, %v392
    %vm395 = vcmask 1045509
    %v396 = vsel %vm395, %v378, %v394
    %vm397 = vcmask 1046534
    %v398 = vsel %vm397, %v382, %v396
    %vm399 = vcmask 1047559
    %v400 = vsel %vm399, %v386, %v398
    %402 = vxpose.xlu0.b32.start [1/16] %v400, 128
    %403 = vxpose.xlu0.b32.cont [2/16] 0.0, 128
    %404 = vxpose.xlu0.b32.cont [3/16] 0.0, 128
    %405 = vxpose.xlu0.b32.cont [4/16] 0.0, 128
    %406 = vxpose.xlu0.b32.cont [5/16] 0.0, 128
    %407 = vxpose.xlu0.b32.cont [6/16] 0.0, 128
    %408 = vxpose.xlu0.b32.cont [7/16] 0.0, 128
    %409 = vxpose.xlu0.b32.cont [8/16] 0.0, 128
    %410 = vxpose.xlu0.b32.cont [9/16] 0.0, 128
    %411 = vxpose.xlu0.b32.cont [10/16] 0.0, 128
    %412 = vxpose.xlu0.b32.cont [11/16] 0.0, 128
    %413 = vxpose.xlu0.b32.cont [12/16] 0.0, 128
    %414 = vxpose.xlu0.b32.cont [13/16] 0.0, 128
    %415 = vxpose.xlu0.b32.cont [14/16] 0.0, 128
    %416 = vxpose.xlu0.b32.cont [15/16] 0.0, 128
    %417 = vxpose.xlu0.b32.end [16/16] 0.0, 128
    %v418 = vpop.trf.xlu0
    %v419 = vpop.trf.xlu0
    %v420 = vpop.trf.xlu0
    %v421 = vpop.trf.xlu0
    %v422 = vpop.trf.xlu0
    %v423 = vpop.trf.xlu0
    %v424 = vpop.trf.xlu0
    %v425 = vpop.trf.xlu0
    %v426 = vpop.trf.xlu0
    %v427 = vpop.trf.xlu0
    %v428 = vpop.trf.xlu0
    %v429 = vpop.trf.xlu0
    %v430 = vpop.trf.xlu0
    %v431 = vpop.trf.xlu0
    %v432 = vpop.trf.xlu0
    %v433 = vpop.trf.xlu0
    %vm434 = vcmask 58368
    %v435 = vsel %vm434, %v418, -inf
    %436 = vmax.xlane.f32.xlu0 %v435
    %v437 = vpop.xlane.xlu0 %436
    %v438 = vsub.f32 %v418, %v437
    %v439 = vmul.f32 %v438, 1.442695
    %v440 = vpow.pop %v439
    %v441 = vsel %vm434, %v440, 0.0
    %442 = vadd.xlane.f32.xlu0 %v441
    %v443 = vpop.xlane.xlu0 %442
    %v444 = vrcp.pop %v443
    %v445 = vmul.f32 %v440, %v444
    %446 = vst.msk [vmem:[#allocation2] sm:$0x3] %vm434, %v445
    // Predicated region
    $region14: #{attention_forward.1} parent=1 // pred_check
      _
    $region15: #{attention_forward.1} parent=1 // pred_check_branch
      %448 = sbr.rel (0) target = $region17
    $region16: #{attention_forward.1} parent=1 // pred_region
      %s450 = ssub.s32 32, 32
      %451 = vsyncadd [#allocation3], %s450
      %s453 = sshll.u32 [#allocation2], 4
      %s454 = int_to_ptr.vmem [resolvable:$true] %s453
      %456 = dma.vmem_to_hbm [thread:$0]  %s454, 32, %s3, [#allocation3]
    $region17: #{attention_forward.1} parent=1 // pred_fallthru
      _
    // Predicated region
    $region18: #{attention_forward.1} parent=1 // pred_check
      _
    $region19: #{attention_forward.1} parent=1 // pred_check_branch
      %458 = sbr.rel (0) target = $region21
    $region20: #{attention_forward.1} parent=1 // pred_region
      %459 = dma.done [#allocation3], 32
    $region21: #{attention_forward.1} parent=1 // pred_fallthru
      _
    %460 = vsyncpa [#allocation3], 1

</llo_original>
